<compile_context>
chip_gen: v6e
topology: v6e:2x2x1
jax: 0.10.0
libtpu: 0.0.40
codegen_flags: <defaults>
</compile_context>

<pallas_src>
import functools

import jax
import jax.numpy as jnp
from jax.experimental import pallas as pl
from jax.experimental.pallas import tpu as pltpu


def _heads_kernel(x_ref, w1_ref, bgb_ref, w2_ref, b2_ref, o_ref, h_ref, *, eps):
    # x_ref:   (tm, D)   token tile (activation dtype)
    # w1_ref:  (D, D)    dense weight, already (in, out)
    # bgb_ref: (3, D)    rows: [dense bias, ln gamma, ln beta]
    # w2_ref:  (D, tv)   decoder weight tile, (in, out)
    # b2_ref:  (1, tv)   decoder bias tile
    # o_ref:   (tm, tv)  logits tile
    # h_ref:   (tm, D)   VMEM scratch holding the transformed token tile
    j = pl.program_id(1)

    @pl.when(j == 0)
    def _():
        bgb = bgb_ref[...]

        # Dense: x @ W1^T + b1 — native-dtype MXU matmul, f32 accumulation.
        h = jnp.dot(x_ref[...], w1_ref[...], preferred_element_type=jnp.float32)
        h = h + bgb[0:1, :].astype(jnp.float32)

        # GELU, tanh approximation (== gelu_new).
        c = 0.7978845608028654  # sqrt(2/pi)
        h = 0.5 * h * (1.0 + jnp.tanh(c * (h + 0.044715 * h * h * h)))

        # LayerNorm over the hidden axis, single-pass variance.
        mu = jnp.mean(h, axis=-1, keepdims=True)
        m2 = jnp.mean(h * h, axis=-1, keepdims=True)
        var = jnp.maximum(m2 - mu * mu, 0.0)
        y = (h - mu) * jax.lax.rsqrt(var + eps)
        y = y * bgb[1:2, :].astype(jnp.float32) + bgb[2:3, :].astype(jnp.float32)

        h_ref[...] = y.astype(h_ref.dtype)

    # Decoder projection for this vocab tile: h @ W2^T + b2.
    logits = jnp.dot(h_ref[...], w2_ref[...], preferred_element_type=jnp.float32)
    logits = logits + b2_ref[...].astype(jnp.float32)
    o_ref[...] = logits.astype(o_ref.dtype)


def _round_up(n, m):
    return ((n + m - 1) // m) * m


def nomic_bert_pretraining_heads(x, w1, b1, gamma, beta, w2, b2, *,
                                 eps=1e-12, tm=256, tv=512):
    """x: (B, S, D). w1: (D, D) torch layout (out, in). w2: (V, D) torch layout.
    Returns logits (B, S, V)."""
    B, S, D = x.shape
    V, D2 = w2.shape
    assert D2 == D, "decoder weight inner dim must match n_embd"
    M = B * S
    dtype = x.dtype
    itemsize = jnp.dtype(dtype).itemsize

    # Tile sizes: hardware-friendly multiples, clamped for small problems.
    tm = _round_up(max(16, min(tm, _round_up(M, 16))), 16)
    tv = _round_up(max(128, min(tv, _round_up(V, 128))), 128)
    M_pad = _round_up(M, tm)
    V_pad = _round_up(V, tv)

    x2 = x.reshape(M, D)
    if M_pad != M:
        x2 = jnp.pad(x2, ((0, M_pad - M), (0, 0)))

    w1t = jnp.asarray(w1, dtype).T                               # (in=D, out=D)
    bgb = jnp.stack([b1, gamma, beta], axis=0).astype(dtype)     # (3, D)
    w2t = jnp.asarray(w2, dtype).T                               # (D, V)
    b2r = jnp.asarray(b2, dtype).reshape(1, V)
    if V_pad != V:
        w2t = jnp.pad(w2t, ((0, 0), (0, V_pad - V)))
        b2r = jnp.pad(b2r, ((0, 0), (0, V_pad - V)))

    # VMEM budget (pipeline double-buffers the tiled operands).
    vmem_bytes = (
        2 * tm * D * itemsize        # x token tiles
        + 2 * D * D * itemsize       # resident dense weight
        + 2 * 3 * D * itemsize       # packed b1/gamma/beta
        + 2 * D * tv * itemsize      # decoder weight tiles
        + 2 * tv * itemsize          # decoder bias tiles
        + 2 * tm * tv * itemsize     # logits tiles
        + tm * D * itemsize          # transform scratch
    )
    vmem_limit = min(64 * 1024 * 1024,
                     max(32 * 1024 * 1024, int(1.5 * vmem_bytes) + (4 << 20)))

    kernel = functools.partial(_heads_kernel, eps=eps)

    out = pl.pallas_call(
        kernel,
        out_shape=jax.ShapeDtypeStruct((M_pad, V_pad), dtype),
        grid_spec=pltpu.PrefetchScalarGridSpec(
            num_scalar_prefetch=0,
            grid=(M_pad // tm, V_pad // tv),
            in_specs=[
                pl.BlockSpec((tm, D), lambda i, j: (i, 0)),   # x token tile
                pl.BlockSpec((D, D), lambda i, j: (0, 0)),    # dense weight (resident)
                pl.BlockSpec((3, D), lambda i, j: (0, 0)),    # b1 / gamma / beta
                pl.BlockSpec((D, tv), lambda i, j: (0, j)),   # decoder weight tile
                pl.BlockSpec((1, tv), lambda i, j: (0, j)),   # decoder bias tile
            ],
            out_specs=pl.BlockSpec((tm, tv), lambda i, j: (i, j)),
            scratch_shapes=[pltpu.VMEM((tm, D), dtype)],
        ),
        compiler_params=pltpu.CompilerParams(
            dimension_semantics=("parallel", "arbitrary"),
            vmem_limit_bytes=vmem_limit,
        ),
    )(x2, w1t, bgb, w2t, b2r)

    return out[:M, :V].reshape(B, S, V)


def _reference(x, w1, b1, gamma, beta, w2, b2, eps=1e-12):
    h = jnp.einsum("bsd,od->bso", x, w1) + b1
    c = 0.7978845608028654
    h = 0.5 * h * (1.0 + jnp.tanh(c * (h + 0.044715 * h ** 3)))
    mu = jnp.mean(h, axis=-1, keepdims=True)
    var = jnp.mean((h - mu) ** 2, axis=-1, keepdims=True)
    y = (h - mu) * jax.lax.rsqrt(var + eps)
    y = y * gamma + beta
    return jnp.einsum("bsd,vd->bsv", y, w2) + b2


if __name__ == "__main__":
    # Small shapes: batch=2, seq=7 (exercises token padding), n_embd=128,
    # vocab=1000 (exercises vocab padding and >1 vocab tile).
    B, S, D, V = 2, 7, 128, 1000
    eps = 1e-12

    key = jax.random.PRNGKey(0)
    kx, kw1, kb1, kg, kbt, kw2, kb2 = jax.random.split(key, 7)
    x = jax.random.normal(kx, (B, S, D), dtype=jnp.float32)
    w1 = jax.random.normal(kw1, (D, D), dtype=jnp.float32) * 0.02   # torch (out, in)
    b1 = jax.random.normal(kb1, (D,), dtype=jnp.float32) * 0.02
    gamma = 1.0 + 0.1 * jax.random.normal(kg, (D,), dtype=jnp.float32)
    beta = 0.1 * jax.random.normal(kbt, (D,), dtype=jnp.float32)
    w2 = jax.random.normal(kw2, (V, D), dtype=jnp.float32) * 0.02   # torch (out=V, in=D)
    b2 = jax.random.normal(kb2, (V,), dtype=jnp.float32) * 0.02

    out = nomic_bert_pretraining_heads(x, w1, b1, gamma, beta, w2, b2,
                                       eps=eps, tm=256, tv=512)
    out = jax.block_until_ready(out)

    ref = _reference(x, w1, b1, gamma, beta, w2, b2, eps=eps)
    assert out.shape == (B, S, V)
    assert jnp.allclose(out, ref, atol=2e-3, rtol=2e-3), "mismatch vs reference"

    print("KERNEL_OK")
</pallas_src>

<mosaic_0001>
module attributes {stable_mosaic.version = 11 : i64} {
  func.func @_heads_kernel(%arg0: i32, %arg1: i32, %arg2: memref<16x128xf32, #tpu.memory_space<vmem>>, %arg3: memref<128x128xf32, #tpu.memory_space<vmem>>, %arg4: memref<3x128xf32, #tpu.memory_space<vmem>>, %arg5: memref<128x512xf32, #tpu.memory_space<vmem>>, %arg6: memref<1x512xf32, #tpu.memory_space<vmem>>, %arg7: memref<16x512xf32, #tpu.memory_space<vmem>>, %arg8: memref<16x128xf32, #tpu.memory_space<vmem>>) attributes {dimension_semantics = [#tpu.dimension_semantics<parallel>, #tpu.dimension_semantics<arbitrary>], iteration_bounds = array<i64: 1, 2>, scalar_prefetch = 0 : i64, scratch_operands = 1 : i64, tpu.core_type = #tpu.core_type<tc>, window_params = [{transform_indices = @transform_0, window_bounds = array<i64: 16, 128>}, {pipeline_mode = #tpu.pipeline_mode<synchronous>, transform_indices = @transform_1, window_bounds = array<i64: 128, 128>}, {pipeline_mode = #tpu.pipeline_mode<synchronous>, transform_indices = @transform_2, window_bounds = array<i64: 3, 128>}, {transform_indices = @transform_3, window_bounds = array<i64: 128, 512>}, {transform_indices = @transform_4, window_bounds = array<i64: 1, 512>}, {transform_indices = @transform_5, window_bounds = array<i64: 16, 512>}]} {
    %c0_i32 = arith.constant 0 : i32
    %0 = arith.cmpi eq, %arg1, %c0_i32 : i32
    %1 = arith.extui %0 : i1 to i32
    %c0_i32_0 = arith.constant 0 : i32
    %2 = arith.cmpi ne, %1, %c0_i32_0 : i32
    scf.if %2 {
      %c0_8 = arith.constant 0 : index
      %c0_9 = arith.constant 0 : index
      %10 = vector.load %arg4[%c0_8, %c0_9] : memref<3x128xf32, #tpu.memory_space<vmem>>, vector<3x128xf32>
      %c0_10 = arith.constant 0 : index
      %c0_11 = arith.constant 0 : index
      %11 = vector.load %arg2[%c0_10, %c0_11] : memref<16x128xf32, #tpu.memory_space<vmem>>, vector<16x128xf32>
      %c0_12 = arith.constant 0 : index
      %c0_13 = arith.constant 0 : index
      %12 = vector.load %arg3[%c0_12, %c0_13] : memref<128x128xf32, #tpu.memory_space<vmem>>, vector<128x128xf32>
      %cst_14 = arith.constant dense<0.000000e+00> : vector<16x128xf32>
      %13 = tpu.matmul %11, %12, %cst_14 {dimension_numbers = #tpu.dot_dimension_numbers<[1], [0], [0], [1], [0, 0, 1, 1], [], []>} : vector<16x128xf32>, vector<128x128xf32>, vector<16x128xf32> -> vector<16x128xf32>
      %14 = vector.extract_strided_slice %10 {offsets = [0, 0], sizes = [1, 128], strides = [1, 1]} : vector<3x128xf32> to vector<1x128xf32>
      %15 = vector.broadcast %14 : vector<1x128xf32> to vector<16x128xf32>
      %16 = arith.addf %13, %15 : vector<16x128xf32>
      %cst_15 = arith.constant 5.000000e-01 : f32
      %17 = vector.broadcast %cst_15 : f32 to vector<16x128xf32>
      %18 = arith.mulf %17, %16 : vector<16x128xf32>
      %cst_16 = arith.constant 4.471500e-02 : f32
      %19 = vector.broadcast %cst_16 : f32 to vector<16x128xf32>
      %20 = arith.mulf %19, %16 : vector<16x128xf32>
      %21 = arith.mulf %20, %16 : vector<16x128xf32>
      %22 = arith.mulf %21, %16 : vector<16x128xf32>
      %23 = arith.addf %16, %22 : vector<16x128xf32>
      %cst_17 = arith.constant 0.797884583 : f32
      %24 = vector.broadcast %cst_17 : f32 to vector<16x128xf32>
      %25 = arith.mulf %24, %23 : vector<16x128xf32>
      %26 = math.tanh %25 : vector<16x128xf32>
      %cst_18 = arith.constant 1.000000e+00 : f32
      %27 = vector.broadcast %cst_18 : f32 to vector<16x128xf32>
      %28 = arith.addf %27, %26 : vector<16x128xf32>
      %29 = arith.mulf %18, %28 : vector<16x128xf32>
      %cst_19 = arith.constant dense<0.000000e+00> : vector<16xf32>
      %30 = vector.multi_reduction <add>, %29, %cst_19 [1] : vector<16x128xf32> to vector<16xf32>
      %31 = vector.shape_cast %30 : vector<16xf32> to vector<16x1xf32>
      %cst_20 = arith.constant 1.280000e+02 : f32
      %32 = vector.broadcast %cst_20 : f32 to vector<16x1xf32>
      %33 = arith.divf %31, %32 : vector<16x1xf32>
      %34 = arith.mulf %29, %29 : vector<16x128xf32>
      %cst_21 = arith.constant dense<0.000000e+00> : vector<16xf32>
      %35 = vector.multi_reduction <add>, %34, %cst_21 [1] : vector<16x128xf32> to vector<16xf32>
      %36 = vector.shape_cast %35 : vector<16xf32> to vector<16x1xf32>
      %cst_22 = arith.constant 1.280000e+02 : f32
      %37 = vector.broadcast %cst_22 : f32 to vector<16x1xf32>
      %38 = arith.divf %36, %37 : vector<16x1xf32>
      %39 = arith.mulf %33, %33 : vector<16x1xf32>
      %40 = arith.subf %38, %39 : vector<16x1xf32>
      %cst_23 = arith.constant 0.000000e+00 : f32
      %41 = vector.broadcast %cst_23 : f32 to vector<16x1xf32>
      %42 = arith.maximumf %40, %41 : vector<16x1xf32>
      %43 = vector.broadcast %33 : vector<16x1xf32> to vector<16x128xf32>
      %44 = arith.subf %29, %43 : vector<16x128xf32>
      %cst_24 = arith.constant 9.99999996E-13 : f32
      %45 = vector.broadcast %cst_24 : f32 to vector<16x1xf32>
      %46 = arith.addf %42, %45 : vector<16x1xf32>
      %47 = math.rsqrt %46 : vector<16x1xf32>
      %48 = vector.broadcast %47 : vector<16x1xf32> to vector<16x128xf32>
      %49 = arith.mulf %44, %48 : vector<16x128xf32>
      %50 = vector.extract_strided_slice %10 {offsets = [1, 0], sizes = [1, 128], strides = [1, 1]} : vector<3x128xf32> to vector<1x128xf32>
      %51 = vector.broadcast %50 : vector<1x128xf32> to vector<16x128xf32>
      %52 = arith.mulf %49, %51 : vector<16x128xf32>
      %53 = vector.extract_strided_slice %10 {offsets = [2, 0], sizes = [1, 128], strides = [1, 1]} : vector<3x128xf32> to vector<1x128xf32>
      %54 = vector.broadcast %53 : vector<1x128xf32> to vector<16x128xf32>
      %55 = arith.addf %52, %54 : vector<16x128xf32>
      %c0_25 = arith.constant 0 : index
      %c0_26 = arith.constant 0 : index
      %56 = vector.load %arg8[%c0_25, %c0_26] : memref<16x128xf32, #tpu.memory_space<vmem>>, vector<16x128xf32>
      tpu.vector_store %arg8[%c0_25, %c0_26], %55 {strides = array<i32>} : memref<16x128xf32, #tpu.memory_space<vmem>>, vector<16x128xf32>,
    } else {
    }
    %c0 = arith.constant 0 : index
    %c0_1 = arith.constant 0 : index
    %3 = vector.load %arg8[%c0, %c0_1] : memref<16x128xf32, #tpu.memory_space<vmem>>, vector<16x128xf32>
    %c0_2 = arith.constant 0 : index
    %c0_3 = arith.constant 0 : index
    %4 = vector.load %arg5[%c0_2, %c0_3] : memref<128x512xf32, #tpu.memory_space<vmem>>, vector<128x512xf32>
    %cst = arith.constant dense<0.000000e+00> : vector<16x512xf32>
    %5 = tpu.matmul %3, %4, %cst {dimension_numbers = #tpu.dot_dimension_numbers<[1], [0], [0], [1], [0, 0, 1, 1], [], []>} : vector<16x128xf32>, vector<128x512xf32>, vector<16x512xf32> -> vector<16x512xf32>
    %c0_4 = arith.constant 0 : index
    %c0_5 = arith.constant 0 : index
    %6 = vector.load %arg6[%c0_4, %c0_5] : memref<1x512xf32, #tpu.memory_space<vmem>>, vector<1x512xf32>
    %7 = vector.broadcast %6 : vector<1x512xf32> to vector<16x512xf32>
    %8 = arith.addf %5, %7 : vector<16x512xf32>
    %c0_6 = arith.constant 0 : index
    %c0_7 = arith.constant 0 : index
    %9 = vector.load %arg7[%c0_6, %c0_7] : memref<16x512xf32, #tpu.memory_space<vmem>>, vector<16x512xf32>
    tpu.vector_store %arg7[%c0_6, %c0_7], %8 {strides = array<i32>} : memref<16x512xf32, #tpu.memory_space<vmem>>, vector<16x512xf32>,
    return
  }
  func.func @transform_0(%arg0: i32, %arg1: i32) -> (i32, i32) {
    %c0_i32 = arith.constant 0 : i32
    %c0_i32_0 = arith.constant 0 : i32
    return %arg0, %c0_i32 : i32, i32
  }
  func.func @transform_1(%arg0: i32, %arg1: i32) -> (i32, i32) {
    %c0_i32 = arith.constant 0 : i32
    %c0_i32_0 = arith.constant 0 : i32
    %c0_i32_1 = arith.constant 0 : i32
    return %c0_i32, %c0_i32_0 : i32, i32
  }
  func.func @transform_2(%arg0: i32, %arg1: i32) -> (i32, i32) {
    %c0_i32 = arith.constant 0 : i32
    %c0_i32_0 = arith.constant 0 : i32
    %c0_i32_1 = arith.constant 0 : i32
    return %c0_i32, %c0_i32_0 : i32, i32
  }
  func.func @transform_3(%arg0: i32, %arg1: i32) -> (i32, i32) {
    %c0_i32 = arith.constant 0 : i32
    %c0_i32_0 = arith.constant 0 : i32
    return %c0_i32, %arg1 : i32, i32
  }
  func.func @transform_4(%arg0: i32, %arg1: i32) -> (i32, i32) {
    %c0_i32 = arith.constant 0 : i32
    %c0_i32_0 = arith.constant 0 : i32
    return %c0_i32, %arg1 : i32, i32
  }
  func.func @transform_5(%arg0: i32, %arg1: i32) -> (i32, i32) {
    %c0_i32 = arith.constant 0 : i32
    return %arg0, %arg1 : i32, i32
  }
}

</mosaic_0001>

<llo_original>
// kernel: tpu_custom_call.1
$region0: #{tpu_custom_call.1}
  #allocation0 [shape = 'u32[]', space=smem, size = 0x4, offset = 0x4, fixed_abs, tag = 'smem constant byte address 0x4 - core index']
  #allocation1 [shape = 'u32[144,128]{1,0:T(1,128)}', space=vmem, size = 0x12000, scoped, tag = 'internal scratch']
  #allocation2 [shape = 'f32[16,128]{1,0:T(8,128)}', space=vmem, size = 0x2000, scoped, tag = 'scratch operand']
  %s0 = inlined_call_operand.hbm [shape: f32[16,128], index: 0, kind: input, shape index: {}]
  %s1 = inlined_call_operand.hbm [shape: f32[128,128], index: 1, kind: input, shape index: {}]
  %s2 = inlined_call_operand.hbm [shape: f32[3,128], index: 2, kind: input, shape index: {}]
  %s3 = inlined_call_operand.hbm [shape: f32[128,1024], index: 3, kind: input, shape index: {}]
  %s4 = inlined_call_operand.hbm [shape: f32[1,1024], index: 4, kind: input, shape index: {}]
  %s5 = inlined_call_operand.hbm [shape: f32[16,1024], index: 5, kind: output, shape index: {}]
  %s6 = sld [smem:[#allocation0]]
  $region77: #{tpu_custom_call.1} parent=0
    _
  %s8 = ssub.s32 1, %s6
  %s9 = scalar_select 0, %s8, %s6
  $region1: #{tpu_custom_call.1} parent=0
    #allocation3 [shape = 'u8[8192]{0}', space=vmem, size = 0x2000, scoped, tag = 'input window, operand 0, single buffered']
    #allocation4 [shape = 's32[2]{0}', space=sflag, size = 0x8, scoped, tag = 'scoped memory for tpu_custom_call.1']
    #allocation5 [shape = 's32[2]{0}', space=sflag, size = 0x8, scoped, tag = 'scoped memory for tpu_custom_call.1']
    #allocation6 [shape = 'u8[65536]{0}', space=vmem, size = 0x10000, scoped, tag = 'input window, operand 1, single buffered']
    #allocation7 [shape = 's32[1]{0}', space=sflag, size = 0x4, scoped, tag = 'scoped memory for tpu_custom_call.1']
    #allocation8 [shape = 'u8[2048]{0}', space=vmem, size = 0x800, scoped, tag = 'input window, operand 2, single buffered']
    #allocation9 [shape = 'u8[524288]{0}', space=vmem, size = 0x80000, scoped, tag = 'input window, operand 3']
    #allocation10 [shape = 's32[2]{0}', space=sflag, size = 0x8, scoped, tag = 'scoped memory for tpu_custom_call.1']
    #allocation11 [shape = 'u8[4096]{0}', space=vmem, size = 0x1000, scoped, tag = 'input window, operand 4']
    #allocation12 [shape = 'u8[65536]{0}', space=vmem, size = 0x10000, scoped, tag = 'output window, operand 0']
    %10 = vsyncpa [#allocation4], 0
    %11 = vsyncpa [#allocation7], 0
    %12 = vsyncpa [#allocation10], 0
    %s13 = scalar_lea.sflag [#allocation10], 1
    %14 = vsyncpa %s13, 0
    %15 = vsyncpa [#allocation5], 0
    %s16 = scalar_lea.sflag [#allocation5], 1
    %17 = vsyncpa %s16, 0
    loop: start=0, step=1, limit=4
    $region2: #{tpu_custom_call.1} parent=1 // loop_pre_header
      _
    $region3: #{tpu_custom_call.1} parent=1 // loop_header
      %s19 = sphi 0, %s23
      %p20 = scmp.ge.s32.totalorder %s19, 4
      %s26 = sphi 0, %s38
      %s27 = sphi 0, %s34
      %s28 = sphi 0, %s26
      %s29 = sphi 0, %s27
      %s30 = sphi 0, %s28
      %s31 = sphi 0, %s29
      %s41 = sphi 0, %s43
      %s44 = sphi 0, %s41
      %s45 = sphi 0, %s44
      %s61 = sphi 0, %s45
      %s65 = sphi 0, %s65
      %s67 = sphi 0, %s65
      %s68 = sphi 0, %s67
      %s82 = sphi 0, %s68
      %s86 = sphi 0, %s86
      %s88 = sphi 0, %s86
      %s89 = sphi 0, %s88
      %s103 = sphi 0, %s89
      %s109 = sphi 0, %s111
      %s112 = sphi 0, %s109
      %s113 = sphi 0, %s112
      %s129 = sphi 0, %s113
      %s135 = sphi 0, %s137
      %s138 = sphi 0, %s135
      %s139 = sphi 0, %s138
      %s155 = sphi 0, %s139
      %s163 = sphi 0, %s165
      %s166 = sphi 0, %s163
      %s167 = sphi 0, %s166
      %s183 = sphi 0, %s167
    $region4: #{tpu_custom_call.1} parent=1 // loop_header_branch
      %22 = sbr.rel (%p20) target = $region8
    $region5: #{tpu_custom_call.1} parent=1 // loop_body
      %s24 = ssub.s32 %s19, 1
      %s25 = ssub.s32 %s19, 2
      %s32 = sadd.s32 1, %s27
      %p33 = scmp.ge.s32.totalorder %s32, 2
      %s34 = scalar_select %p33, 0, %s32
      %s35 = sadd.s32 1, %s26
      %s36 = scalar_select %p33, %s35, %s26
      %p37 = scmp.ge.s32.totalorder %s36, 1
      %s38 = scalar_select %p37, 0, %s36
      %s39 = ssub.s32 %s26, %s38
      %p40 = scmp.eq.s32.totalorder %s39, 0
      %s42 = sadd.s32 %s41, 1
      %s43 = scalar_select %p40, %s41, %s42
      %p46 = pneg %p40
      %p47 = scmp.eq.s32.totalorder %s19, 1
      %p48 = por %p46, %p47
      %p49 = scmp.ne.s32.totalorder %s41, %s44
      %p50 = scmp.eq.s32.totalorder %s19, 0
      %p51 = por %p49, %p50
      %p52 = scmp.ne.s32.totalorder %s41, %s44
      %p53 = scmp.eq.s32.totalorder %s24, 1
      %p54 = por %p52, %p53
      %p55 = scmp.ne.s32.totalorder %s44, %s45
      %p56 = scmp.eq.s32.totalorder %s24, 0
      %p57 = por %p55, %p56
      %p58 = scmp.ne.s32.totalorder %s44, %s45
      %p59 = scmp.eq.s32.totalorder %s25, 1
      %p60 = por %p58, %p59
      %p62 = scmp.ne.s32.totalorder %s45, %s61
      %p63 = scmp.eq.s32.totalorder %s25, 0
      %p64 = por %p62, %p63
      %s66 = sadd.s32 %s65, 1
      %p69 = scmp.eq.s32.totalorder %s19, 1
      %p70 = scmp.ne.s32.totalorder %s65, %s67
      %p71 = scmp.eq.s32.totalorder %s19, 0
      %p72 = por %p70, %p71
      %p73 = scmp.ne.s32.totalorder %s65, %s67
      %p74 = scmp.eq.s32.totalorder %s24, 1
      %p75 = por %p73, %p74
      %p76 = scmp.ne.s32.totalorder %s67, %s68
      %p77 = scmp.eq.s32.totalorder %s24, 0
      %p78 = por %p76, %p77
      %p79 = scmp.ne.s32.totalorder %s67, %s68
      %p80 = scmp.eq.s32.totalorder %s25, 1
      %p81 = por %p79, %p80
      %p83 = scmp.ne.s32.totalorder %s68, %s82
      %p84 = scmp.eq.s32.totalorder %s25, 0
      %p85 = por %p83, %p84
      %s87 = sadd.s32 %s86, 1
      %p90 = scmp.eq.s32.totalorder %s19, 1
      %p91 = scmp.ne.s32.totalorder %s86, %s88
      %p92 = scmp.eq.s32.totalorder %s19, 0
      %p93 = por %p91, %p92
      %p94 = scmp.ne.s32.totalorder %s86, %s88
      %p95 = scmp.eq.s32.totalorder %s24, 1
      %p96 = por %p94, %p95
      %p97 = scmp.ne.s32.totalorder %s88, %s89
      %p98 = scmp.eq.s32.totalorder %s24, 0
      %p99 = por %p97, %p98
      %p100 = scmp.ne.s32.totalorder %s88, %s89
      %p101 = scmp.eq.s32.totalorder %s25, 1
      %p102 = por %p100, %p101
      %p104 = scmp.ne.s32.totalorder %s89, %s103
      %p105 = scmp.eq.s32.totalorder %s25, 0
      %p106 = por %p104, %p105
      %s107 = ssub.s32 %s27, %s34
      %p108 = scmp.eq.s32.totalorder %s107, 0
      %s110 = sadd.s32 %s109, 1
      %s111 = scalar_select %p108, %s109, %s110
      %p114 = pneg %p108
      %p115 = scmp.eq.s32.totalorder %s19, 1
      %p116 = por %p114, %p115
      %p117 = scmp.ne.s32.totalorder %s109, %s112
      %p118 = scmp.eq.s32.totalorder %s19, 0
      %p119 = por %p117, %p118
      %p120 = scmp.ne.s32.totalorder %s109, %s112
      %p121 = scmp.eq.s32.totalorder %s24, 1
      %p122 = por %p120, %p121
      %p123 = scmp.ne.s32.totalorder %s112, %s113
      %p124 = scmp.eq.s32.totalorder %s24, 0
      %p125 = por %p123, %p124
      %p126 = scmp.ne.s32.totalorder %s112, %s113
      %p127 = scmp.eq.s32.totalorder %s25, 1
      %p128 = por %p126, %p127
      %p130 = scmp.ne.s32.totalorder %s113, %s129
      %p131 = scmp.eq.s32.totalorder %s25, 0
      %p132 = por %p130, %p131
      %s133 = ssub.s32 %s27, %s34
      %p134 = scmp.eq.s32.totalorder %s133, 0
      %s136 = sadd.s32 %s135, 1
      %s137 = scalar_select %p134, %s135, %s136
      %p140 = pneg %p134
      %p141 = scmp.eq.s32.totalorder %s19, 1
      %p142 = por %p140, %p141
      %p143 = scmp.ne.s32.totalorder %s135, %s138
      %p144 = scmp.eq.s32.totalorder %s19, 0
      %p145 = por %p143, %p144
      %p146 = scmp.ne.s32.totalorder %s135, %s138
      %p147 = scmp.eq.s32.totalorder %s24, 1
      %p148 = por %p146, %p147
      %p149 = scmp.ne.s32.totalorder %s138, %s139
      %p150 = scmp.eq.s32.totalorder %s24, 0
      %p151 = por %p149, %p150
      %p152 = scmp.ne.s32.totalorder %s138, %s139
      %p153 = scmp.eq.s32.totalorder %s25, 1
      %p154 = por %p152, %p153
      %p156 = scmp.ne.s32.totalorder %s139, %s155
      %p157 = scmp.eq.s32.totalorder %s25, 0
      %p158 = por %p156, %p157
      %s159 = ssub.s32 %s26, %s38
      %s160 = ssub.s32 %s27, %s34
      %s161 = sor.u32 %s159, %s160
      %p162 = scmp.eq.s32.totalorder %s161, 0
      %s164 = sadd.s32 %s163, 1
      %s165 = scalar_select %p162, %s163, %s164
      %p168 = pneg %p162
      %p169 = scmp.eq.s32.totalorder %s19, 1
      %p170 = por %p168, %p169
      %p171 = scmp.ne.s32.totalorder %s163, %s166
      %p172 = scmp.eq.s32.totalorder %s19, 0
      %p173 = por %p171, %p172
      %p174 = scmp.ne.s32.totalorder %s163, %s166
      %p175 = scmp.eq.s32.totalorder %s24, 1
      %p176 = por %p174, %p175
      %p177 = scmp.ne.s32.totalorder %s166, %s167
      %p178 = scmp.eq.s32.totalorder %s24, 0
      %p179 = por %p177, %p178
      %p180 = scmp.ne.s32.totalorder %s166, %s167
      %p181 = scmp.eq.s32.totalorder %s25, 1
      %p182 = por %p180, %p181
      %p184 = scmp.ne.s32.totalorder %s167, %s183
      %p185 = scmp.eq.s32.totalorder %s25, 0
      %p186 = por %p184, %p185
      %p187 = scmp.le.s32.totalorder 1, %s19
      %p188 = scmp.lt.s32.totalorder %s19, 3
      %p189 = pnand %p187, %p188
      %p190 = pneg %p189
      // Predicated region
      $region9: #{tpu_custom_call.1} parent=5 // pred_check
        _
      $region10: #{tpu_custom_call.1} parent=5 // pred_check_branch
        %192 = sbr.rel (%p189) target = $region12
      $region11: #{tpu_custom_call.1} parent=5 // pred_region
        %s193 = ssub.s32 %s19, 1
        // Predicated region
        $region13: #{tpu_custom_call.1} parent=11 // pred_check
          %p194 = pneg %p57
        $region14: #{tpu_custom_call.1} parent=11 // pred_check_branch
          %196 = sbr.rel (%p194) target = $region16
        $region15: #{tpu_custom_call.1} parent=11 // pred_region
          %s197 = smul.u32 2, %s28
          %s199 = ssub.s32 256, 256
          %200 = vsyncadd [#allocation4], %s199
          %s201 = smul.addr %s197, 128
          %s202 = scalar_lea.hbm %s0, %s201
          %s203 = sshll.u32 [#allocation3], 4
          %s204 = int_to_ptr.vmem [resolvable:$true] %s203
          %209 = dma.hbm_to_vmem [thread:$0]  %s202, 256, %s204, [#allocation4], 128, 128, 8
        $region16: #{tpu_custom_call.1} parent=11 // pred_fallthru
          _
        // Predicated region
        $region17: #{tpu_custom_call.1} parent=11 // pred_check
          %p210 = pneg %p78
        $region18: #{tpu_custom_call.1} parent=11 // pred_check_branch
          %212 = sbr.rel (%p210) target = $region20
        $region19: #{tpu_custom_call.1} parent=11 // pred_region
          %s214 = ssub.s32 2048, 2048
          %215 = vsyncadd [#allocation7], %s214
          %s216 = sshll.u32 [#allocation6], 4
          %s217 = int_to_ptr.vmem [resolvable:$true] %s216
          %222 = dma.hbm_to_vmem [thread:$0]  %s1, 2048, %s217, [#allocation7], 128, 128, 8
        $region20: #{tpu_custom_call.1} parent=11 // pred_fallthru
          _
        // Predicated region
        $region21: #{tpu_custom_call.1} parent=11 // pred_check
          %p223 = pneg %p99
        $region22: #{tpu_custom_call.1} parent=11 // pred_check_branch
          %225 = sbr.rel (%p223) target = $region24
        $region23: #{tpu_custom_call.1} parent=11 // pred_region
          %s227 = ssub.s32 64, 64
          %228 = vsyncadd [#allocation7], %s227
          %s230 = sshll.u32 [#allocation8], 4
          %s231 = int_to_ptr.vmem [resolvable:$true] %s230
          %233 = dma.hbm_to_vmem [thread:$0]  %s2, 64, %s231, [#allocation7]
        $region24: #{tpu_custom_call.1} parent=11 // pred_fallthru
          _
      $region12: #{tpu_custom_call.1} parent=5 // pred_fallthru
        _
      %p234 = scmp.lt.s32.totalorder %s19, 2
      // Predicated region
      $region25: #{tpu_custom_call.1} parent=5 // pred_check
        %p235 = pneg %p234
      $region26: #{tpu_custom_call.1} parent=5 // pred_check_branch
        %237 = sbr.rel (%p235) target = $region28
      $region27: #{tpu_custom_call.1} parent=5 // pred_region
        // Predicated region
        $region29: #{tpu_custom_call.1} parent=27 // pred_check
          %p238 = pneg %p119
        $region30: #{tpu_custom_call.1} parent=27 // pred_check_branch
          %240 = sbr.rel (%p238) target = $region32
        $region31: #{tpu_custom_call.1} parent=27 // pred_region
          %s241 = sand.u32 %s19, 1
          %s242 = scalar_lea.sflag [#allocation10], %s241
          %s243 = sand.u32 %s109, 1
          %s244 = smul.addr %s243, 512
          %s245 = scalar_lea.vmem [#allocation9], %s244
          %s246 = smul.u32 4, %s27
          %s248 = ssub.s32 8192, 8192
          %249 = vsyncadd %s242, %s248
          %s250 = smul.addr %s246, 128
          %s251 = scalar_lea.hbm %s3, %s250
          %s252 = sshll.u32 %s245, 4
          %s253 = int_to_ptr.vmem [resolvable:$true] %s252
          %258 = dma.hbm_to_vmem [thread:$0]  %s251, 8192, %s253, %s242, 1024, 512, 32
        $region32: #{tpu_custom_call.1} parent=27 // pred_fallthru
          _
        // Predicated region
        $region33: #{tpu_custom_call.1} parent=27 // pred_check
          %p259 = pneg %p145
        $region34: #{tpu_custom_call.1} parent=27 // pred_check_branch
          %261 = sbr.rel (%p259) target = $region36
        $region35: #{tpu_custom_call.1} parent=27 // pred_region
          %s262 = sand.u32 %s19, 1
          %s263 = scalar_lea.sflag [#allocation10], %s262
          %s264 = sand.u32 %s135, 1
          %s265 = smul.addr %s264, 4
          %s266 = scalar_lea.vmem [#allocation11], %s265
          %s267 = smul.u32 4, %s27
          %s269 = ssub.s32 64, 64
          %270 = vsyncadd %s263, %s269
          %s271 = smul.addr %s267, 16
          %s272 = scalar_lea.hbm %s4, %s271
          %s274 = sshll.u32 %s266, 4
          %s275 = int_to_ptr.vmem [resolvable:$true] %s274
          %277 = dma.hbm_to_vmem [thread:$0]  %s272, 64, %s275, %s263
        $region36: #{tpu_custom_call.1} parent=27 // pred_fallthru
          _
      $region28: #{tpu_custom_call.1} parent=5 // pred_fallthru
        _
      %p278 = scmp.le.s32.totalorder 1, %s19
      %p279 = scmp.lt.s32.totalorder %s19, 3
      %p280 = pnand %p278, %p279
      %p281 = pneg %p280
      // Predicated region
      $region37: #{tpu_custom_call.1} parent=5 // pred_check
        _
      $region38: #{tpu_custom_call.1} parent=5 // pred_check_branch
        %283 = sbr.rel (%p280) target = $region40
      $region39: #{tpu_custom_call.1} parent=5 // pred_region
        %s284 = ssub.s32 %s19, 1
        // Predicated region
        $region41: #{tpu_custom_call.1} parent=39 // pred_check
          %p285 = pneg %p57
        $region42: #{tpu_custom_call.1} parent=39 // pred_check_branch
          %287 = sbr.rel (%p285) target = $region44
        $region43: #{tpu_custom_call.1} parent=39 // pred_region
          %288 = dma.done [#allocation4], 256
        $region44: #{tpu_custom_call.1} parent=39 // pred_fallthru
          _
        // Predicated region
        $region45: #{tpu_custom_call.1} parent=39 // pred_check
          %p289 = pneg %p78
        $region46: #{tpu_custom_call.1} parent=39 // pred_check_branch
          %291 = sbr.rel (%p289) target = $region48
        $region47: #{tpu_custom_call.1} parent=39 // pred_region
          %292 = dma.done [#allocation7], 2048
        $region48: #{tpu_custom_call.1} parent=39 // pred_fallthru
          _
        // Predicated region
        $region49: #{tpu_custom_call.1} parent=39 // pred_check
          %p293 = pneg %p99
        $region50: #{tpu_custom_call.1} parent=39 // pred_check_branch
          %295 = sbr.rel (%p293) target = $region52
        $region51: #{tpu_custom_call.1} parent=39 // pred_region
          %296 = dma.done [#allocation7], 64
        $region52: #{tpu_custom_call.1} parent=39 // pred_fallthru
          _
        %s297 = sand.u32 %s24, 1
        %s298 = scalar_lea.sflag [#allocation10], %s297
        %s299 = sand.u32 %s112, 1
        %s300 = smul.addr %s299, 512
        %s301 = scalar_lea.vmem [#allocation9], %s300
        // Predicated region
        $region53: #{tpu_custom_call.1} parent=39 // pred_check
          %p302 = pneg %p125
        $region54: #{tpu_custom_call.1} parent=39 // pred_check_branch
          %304 = sbr.rel (%p302) target = $region56
        $region55: #{tpu_custom_call.1} parent=39 // pred_region
          %305 = dma.done %s298, 8192
        $region56: #{tpu_custom_call.1} parent=39 // pred_fallthru
          _
        %s306 = sand.u32 %s24, 1
        %s307 = scalar_lea.sflag [#allocation10], %s306
        %s308 = sand.u32 %s138, 1
        %s309 = smul.addr %s308, 4
        %s310 = scalar_lea.vmem [#allocation11], %s309
        // Predicated region
        $region57: #{tpu_custom_call.1} parent=39 // pred_check
          %p311 = pneg %p151
        $region58: #{tpu_custom_call.1} parent=39 // pred_check_branch
          %313 = sbr.rel (%p311) target = $region60
        $region59: #{tpu_custom_call.1} parent=39 // pred_region
          %314 = dma.done %s307, 64
        $region60: #{tpu_custom_call.1} parent=39 // pred_fallthru
          _
        %p315 = pneg %p57
        %p316 = pneg %p54
        %p317 = pneg %p78
        %p318 = pneg %p75
        %p319 = pneg %p99
        %p320 = pneg %p96
        %s321 = sand.u32 %s24, 1
        %s322 = scalar_lea.sflag [#allocation10], %s321
        %s323 = sand.u32 %s112, 1
        %s324 = smul.addr %s323, 512
        %s325 = scalar_lea.vmem [#allocation9], %s324
        %p326 = pneg %p125
        %p327 = pneg %p122
        %s328 = sand.u32 %s24, 1
        %s329 = scalar_lea.sflag [#allocation10], %s328
        %s330 = sand.u32 %s138, 1
        %s331 = smul.addr %s330, 4
        %s332 = scalar_lea.vmem [#allocation11], %s331
        %p333 = pneg %p151
        %p334 = pneg %p148
        %p335 = pneg %p179
        %p336 = pneg %p176
        %s337 = sand.u32 %s166, 1
        %s338 = scalar_lea.sflag [#allocation5], %s337
        %s339 = sand.u32 %s166, 1
        %s340 = smul.addr %s339, 64
        %s341 = scalar_lea.vmem [#allocation12], %s340
        %s342 = smul.u32 2, %s28
        %s343 = smul.u32 4, %s29
        %s344 = smul.u32 4, %s29
        %s345 = smul.u32 2, %s28
        %s346 = smul.u32 4, %s29
        %p347 = scmp.eq.s32.totalorder %s29, 0
        // Predicated region
        $region61: #{tpu_custom_call.1} parent=39 // pred_check
          %p348 = pneg %p347
        $region62: #{tpu_custom_call.1} parent=39 // pred_check_branch
          %350 = sbr.rel (%p348) target = $region64
        $region63: #{tpu_custom_call.1} parent=39 // pred_region
          %v351 = vld [vmem:[#allocation8] sm:$0x7]
          %v352 = vld [vmem:[#allocation3] sm:$0xff]
          %v353 = vld [vmem:[#allocation3 + $0x8] sm:$0xff]
          %v354 = vld [vmem:[#allocation6] sm:$0xff]
          %v355 = vld [vmem:[#allocation6 + $0x8] sm:$0xff]
          %v356 = vld [vmem:[#allocation6 + $0x10] sm:$0xff]
          %v357 = vld [vmem:[#allocation6 + $0x18] sm:$0xff]
          %v358 = vld [vmem:[#allocation6 + $0x20] sm:$0xff]
          %v359 = vld [vmem:[#allocation6 + $0x28] sm:$0xff]
          %v360 = vld [vmem:[#allocation6 + $0x30] sm:$0xff]
          %v361 = vld [vmem:[#allocation6 + $0x38] sm:$0xff]
          %v362 = vld [vmem:[#allocation6 + $0x40] sm:$0xff]
          %v363 = vld [vmem:[#allocation6 + $0x48] sm:$0xff]
          %v364 = vld [vmem:[#allocation6 + $0x50] sm:$0xff]
          %v365 = vld [vmem:[#allocation6 + $0x58] sm:$0xff]
          %v366 = vld [vmem:[#allocation6 + $0x60] sm:$0xff]
          %v367 = vld [vmem:[#allocation6 + $0x68] sm:$0xff]
          %v368 = vld [vmem:[#allocation6 + $0x70] sm:$0xff]
          %v369 = vld [vmem:[#allocation6 + $0x78] sm:$0xff]
          %v370 = vlaneseq
          %v371 = vshrl.u32 %v370, 7
          %v372 = vsub.s32 0, %v371
          %v373 = vrot.slane %v351, %v372
          %374 = vmatprep.subr.mxu0 0.0
          %375 = vmatpush1.msra.mxu0 %v369
          %376 = vmatprep.subr.mxu0 0.0
          %377 = vmatpush1.msra.mxu0 %v368
          %378 = vmatprep.subr.mxu0 0.0
          %379 = vmatpush1.msra.mxu0 %v367
          %380 = vmatprep.subr.mxu0 0.0
          %381 = vmatpush1.msra.mxu0 %v366
          %382 = vmatprep.subr.mxu0 0.0
          %383 = vmatpush1.msra.mxu0 %v365
          %384 = vmatprep.subr.mxu0 0.0
          %385 = vmatpush1.msra.mxu0 %v364
          %386 = vmatprep.subr.mxu0 0.0
          %387 = vmatpush1.msra.mxu0 %v363
          %388 = vmatprep.subr.mxu0 0.0
          %389 = vmatpush1.msra.mxu0 %v362
          %390 = vmatprep.subr.mxu0 0.0
          %391 = vmatpush1.msra.mxu0 %v361
          %392 = vmatprep.subr.mxu0 0.0
          %393 = vmatpush1.msra.mxu0 %v360
          %394 = vmatprep.subr.mxu0 0.0
          %395 = vmatpush1.msra.mxu0 %v359
          %396 = vmatprep.subr.mxu0 0.0
          %397 = vmatpush1.msra.mxu0 %v358
          %398 = vmatprep.subr.mxu0 0.0
          %399 = vmatpush1.msra.mxu0 %v357
          %400 = vmatprep.subr.mxu0 0.0
          %401 = vmatpush1.msra.mxu0 %v356
          %402 = vmatprep.subr.mxu0 0.0
          %403 = vmatpush1.msra.mxu0 %v355
          %404 = vmatprep.subr.mxu0 0.0
          %405 = vmatpush1.msra.mxu0 %v354
          %406 = vmatprep.subr.mxu0 0.0
          %407 = vmatpush2.msra.mxu0 0.0
          %408 = vmatprep.subr.mxu0 0.0
          %409 = vmatpush2.msra.mxu0 0.0
          %410 = vmatprep.subr.mxu0 0.0
          %411 = vmatpush2.msra.mxu0 0.0
          %412 = vmatprep.subr.mxu0 0.0
          %413 = vmatpush2.msra.mxu0 0.0
          %414 = vmatprep.subr.mxu0 0.0
          %415 = vmatpush2.msra.mxu0 0.0
          %416 = vmatprep.subr.mxu0 0.0
          %417 = vmatpush2.msra.mxu0 0.0
          %418 = vmatprep.subr.mxu0 0.0
          %419 = vmatpush2.msra.mxu0 0.0
          %420 = vmatprep.subr.mxu0 0.0
          %421 = vmatpush2.msra.mxu0 0.0
          %422 = vmatprep.subr.mxu0 0.0
          %423 = vmatpush2.msra.mxu0 0.0
          %424 = vmatprep.subr.mxu0 0.0
          %425 = vmatpush2.msra.mxu0 0.0
          %426 = vmatprep.subr.mxu0 0.0
          %427 = vmatpush2.msra.mxu0 0.0
          %428 = vmatprep.subr.mxu0 0.0
          %429 = vmatpush2.msra.mxu0 0.0
          %430 = vmatprep.subr.mxu0 0.0
          %431 = vmatpush2.msra.mxu0 0.0
          %432 = vmatprep.subr.mxu0 0.0
          %433 = vmatpush2.msra.mxu0 0.0
          %434 = vmatprep.subr.mxu0 0.0
          %435 = vmatpush2.msra.mxu0 0.0
          %436 = vmatprep.subr.mxu0 0.0
          %437 = vmatpush2.msra.mxu0 0.0
          %438 = vmatprep.mubr.f32.mxu0 0.0
          %439 = vmatmul.mubr.f32.gmra.mxu0 %v352
          %v440 = vpop.f32.mrf.mxu0
          %v441 = vadd.f32 %v373, %v440
          %v442 = vpop.f32.mrf.mxu0
          %443 = vmatprep.mubr.f32.mxu0 0.0
          %444 = vmatmul.mubr.f32.gmra.mxu0 %v353
          %v445 = vpop.f32.mrf.mxu0
          %v446 = vadd.f32 %v373, %v445
          %v447 = vpop.f32.mrf.mxu0
          %448 = vdwg.mxu0
          %v449 = vmul.f32 %v441, 0.5
          %v450 = vmul.f32 %v446, 0.5
          %v451 = vmul.f32 %v441, 0.044715
          %v452 = vmul.f32 %v446, 0.044715
          %v453 = vmul.f32 %v451, %v441
          %v454 = vmul.f32 %v452, %v446
          %v455 = vmul.f32 %v453, %v441
          %v456 = vmul.f32 %v454, %v446
          %v457 = vadd.f32 %v441, %v455
          %v458 = vadd.f32 %v446, %v456
          %v459 = vmul.f32 %v457, 0.7978846
          %v460 = vmul.f32 %v458, 0.7978846
          %v461 = vtanh.pop %v459
          %v462 = vtanh.pop %v460
          %v463 = vadd.f32 %v461, 1.0
          %v464 = vadd.f32 %v462, 1.0
          %v465 = vmul.f32 %v449, %v463
          %v466 = vmul.f32 %v450, %v464
          %467 = vadd.xlane.f32.xlu0 %v465
          %v468 = vpop.xlane.xlu0 %467
          %469 = vadd.xlane.f32.xlu0 %v466
          %v470 = vpop.xlane.xlu0 %469
          %v471 = vrcp.pop 128.0
          %v472 = vmul.f32 %v468, %v471
          %v473 = vmul.f32 %v470, %v471
          %v474 = vmul.f32 %v465, %v465
          %v475 = vmul.f32 %v466, %v466
          %476 = vadd.xlane.f32.xlu0 %v474
          %v477 = vpop.xlane.xlu0 %476
          %478 = vadd.xlane.f32.xlu0 %v475
          %v479 = vpop.xlane.xlu0 %478
          %v480 = vmul.f32 %v477, %v471
          %v481 = vmul.f32 %v479, %v471
          %v482 = vmul.f32 %v472, %v472
          %v483 = vmul.f32 %v473, %v473
          %v484 = vsub.f32 %v480, %v482
          %v485 = vsub.f32 %v481, %v483
          %v486 = vmax.f32 %v484, 0.0
          %v487 = vmax.f32 %v485, 0.0
          %v488 = vsub.f32 %v465, %v472
          %v489 = vsub.f32 %v466, %v473
          %v490 = vadd.f32 %v486, 1e-12
          %v491 = vadd.f32 %v487, 1e-12
          %v492 = vrsqrt.pop %v490
          %v493 = vrsqrt.pop %v491
          %v494 = vmul.f32 %v488, %v492
          %v495 = vmul.f32 %v489, %v493
          %v496 = vlaneseq
          %v497 = vshrl.u32 %v496, 7
          %v498 = vsub.s32 1, %v497
          %v499 = vrot.slane %v351, %v498
          %v500 = vmul.f32 %v494, %v499
          %v501 = vmul.f32 %v495, %v499
          %v502 = vlaneseq
          %v503 = vshrl.u32 %v502, 7
          %v504 = vsub.s32 2, %v503
          %v505 = vrot.slane %v351, %v504
          %v506 = vadd.f32 %v500, %v505
          %v507 = vadd.f32 %v501, %v505
          %508 = vst [vmem:[#allocation2] sm:$0xff] %v506
          %509 = vst [vmem:[#allocation2 + $0x8] sm:$0xff] %v507
        $region64: #{tpu_custom_call.1} parent=39 // pred_fallthru
          _
        %v510 = vld [vmem:[#allocation2] sm:$0xff]
        %v511 = vld [vmem:[#allocation2 + $0x8] sm:$0xff]
        %v512 = vld [vmem:[%s301] sm:$0xff]
        %v513 = vld [vmem:[%s301 + $0x8] sm:$0xff]
        %v514 = vld [vmem:[%s301 + $0x10] sm:$0xff]
        %v515 = vld [vmem:[%s301 + $0x18] sm:$0xff]
        %v516 = vld [vmem:[%s301 + $0x20] sm:$0xff]
        %v517 = vld [vmem:[%s301 + $0x28] sm:$0xff]
        %v518 = vld [vmem:[%s301 + $0x30] sm:$0xff]
        %v519 = vld [vmem:[%s301 + $0x38] sm:$0xff]
        %v520 = vld [vmem:[%s301 + $0x40] sm:$0xff]
        %v521 = vld [vmem:[%s301 + $0x48] sm:$0xff]
        %v522 = vld [vmem:[%s301 + $0x50] sm:$0xff]
        %v523 = vld [vmem:[%s301 + $0x58] sm:$0xff]
        %v524 = vld [vmem:[%s301 + $0x60] sm:$0xff]
        %v525 = vld [vmem:[%s301 + $0x68] sm:$0xff]
        %v526 = vld [vmem:[%s301 + $0x70] sm:$0xff]
        %v527 = vld [vmem:[%s301 + $0x78] sm:$0xff]
        %v528 = vld [vmem:[%s301 + $0x80] sm:$0xff]
        %v529 = vld [vmem:[%s301 + $0x88] sm:$0xff]
        %v530 = vld [vmem:[%s301 + $0x90] sm:$0xff]
        %v531 = vld [vmem:[%s301 + $0x98] sm:$0xff]
        %v532 = vld [vmem:[%s301 + $0xa0] sm:$0xff]
        %v533 = vld [vmem:[%s301 + $0xa8] sm:$0xff]
        %v534 = vld [vmem:[%s301 + $0xb0] sm:$0xff]
        %v535 = vld [vmem:[%s301 + $0xb8] sm:$0xff]
        %v536 = vld [vmem:[%s301 + $0xc0] sm:$0xff]
        %v537 = vld [vmem:[%s301 + $0xc8] sm:$0xff]
        %v538 = vld [vmem:[%s301 + $0xd0] sm:$0xff]
        %v539 = vld [vmem:[%s301 + $0xd8] sm:$0xff]
        %v540 = vld [vmem:[%s301 + $0xe0] sm:$0xff]
        %v541 = vld [vmem:[%s301 + $0xe8] sm:$0xff]
        %v542 = vld [vmem:[%s301 + $0xf0] sm:$0xff]
        %v543 = vld [vmem:[%s301 + $0xf8] sm:$0xff]
        %v544 = vld [vmem:[%s301 + $0x100] sm:$0xff]
        %v545 = vld [vmem:[%s301 + $0x108] sm:$0xff]
        %v546 = vld [vmem:[%s301 + $0x110] sm:$0xff]
        %v547 = vld [vmem:[%s301 + $0x118] sm:$0xff]
        %v548 = vld [vmem:[%s301 + $0x120] sm:$0xff]
        %v549 = vld [vmem:[%s301 + $0x128] sm:$0xff]
        %v550 = vld [vmem:[%s301 + $0x130] sm:$0xff]
        %v551 = vld [vmem:[%s301 + $0x138] sm:$0xff]
        %v552 = vld [vmem:[%s301 + $0x140] sm:$0xff]
        %v553 = vld [vmem:[%s301 + $0x148] sm:$0xff]
        %v554 = vld [vmem:[%s301 + $0x150] sm:$0xff]
        %v555 = vld [vmem:[%s301 + $0x158] sm:$0xff]
        %v556 = vld [vmem:[%s301 + $0x160] sm:$0xff]
        %v557 = vld [vmem:[%s301 + $0x168] sm:$0xff]
        %v558 = vld [vmem:[%s301 + $0x170] sm:$0xff]
        %v559 = vld [vmem:[%s301 + $0x178] sm:$0xff]
        %v560 = vld [vmem:[%s301 + $0x180] sm:$0xff]
        %v561 = vld [vmem:[%s301 + $0x188] sm:$0xff]
        %v562 = vld [vmem:[%s301 + $0x190] sm:$0xff]
        %v563 = vld [vmem:[%s301 + $0x198] sm:$0xff]
        %v564 = vld [vmem:[%s301 + $0x1a0] sm:$0xff]
        %v565 = vld [vmem:[%s301 + $0x1a8] sm:$0xff]
        %v566 = vld [vmem:[%s301 + $0x1b0] sm:$0xff]
        %v567 = vld [vmem:[%s301 + $0x1b8] sm:$0xff]
        %v568 = vld [vmem:[%s301 + $0x1c0] sm:$0xff]
        %v569 = vld [vmem:[%s301 + $0x1c8] sm:$0xff]
        %v570 = vld [vmem:[%s301 + $0x1d0] sm:$0xff]
        %v571 = vld [vmem:[%s301 + $0x1d8] sm:$0xff]
        %v572 = vld [vmem:[%s301 + $0x1e0] sm:$0xff]
        %v573 = vld [vmem:[%s301 + $0x1e8] sm:$0xff]
        %v574 = vld [vmem:[%s301 + $0x1f0] sm:$0xff]
        %v575 = vld [vmem:[%s301 + $0x1f8] sm:$0xff]
        %v576 = vld [vmem:[%s310] sm:$0xf]
        %v578 = vlaneseq
        %v579 = vshrl.u32 %v578, 7
        %v580 = vsub.s32 0, %v579
        %v581 = vrot.slane %v576, %v580
        %v582 = vlaneseq
        %v583 = vshrl.u32 %v582, 7
        %v584 = vsub.s32 1, %v583
        %v585 = vrot.slane %v576, %v584
        %v586 = vlaneseq
        %v587 = vshrl.u32 %v586, 7
        %v588 = vsub.s32 2, %v587
        %v589 = vrot.slane %v576, %v588
        %v590 = vlaneseq
        %v591 = vshrl.u32 %v590, 7
        %v592 = vsub.s32 3, %v591
        %v593 = vrot.slane %v576, %v592
        %598 = vmatprep.subr.mxu0 %v573
        %599 = vmatpush1.msra.mxu0 %v572
        %600 = vmatprep.subr.mxu0 %v569
        %601 = vmatpush1.msra.mxu0 %v568
        %602 = vmatprep.subr.mxu0 %v565
        %603 = vmatpush1.msra.mxu0 %v564
        %604 = vmatprep.subr.mxu0 %v561
        %605 = vmatpush1.msra.mxu0 %v560
        %606 = vmatprep.subr.mxu0 %v557
        %607 = vmatpush1.msra.mxu0 %v556
        %608 = vmatprep.subr.mxu0 %v553
        %609 = vmatpush1.msra.mxu0 %v552
        %610 = vmatprep.subr.mxu0 %v549
        %611 = vmatpush1.msra.mxu0 %v548
        %612 = vmatprep.subr.mxu0 %v545
        %613 = vmatpush1.msra.mxu0 %v544
        %614 = vmatprep.subr.mxu0 %v541
        %615 = vmatpush1.msra.mxu0 %v540
        %616 = vmatprep.subr.mxu0 %v537
        %617 = vmatpush1.msra.mxu0 %v536
        %618 = vmatprep.subr.mxu0 %v533
        %619 = vmatpush1.msra.mxu0 %v532
        %620 = vmatprep.subr.mxu0 %v529
        %621 = vmatpush1.msra.mxu0 %v528
        %622 = vmatprep.subr.mxu0 %v525
        %623 = vmatpush1.msra.mxu0 %v524
        %624 = vmatprep.subr.mxu0 %v521
        %625 = vmatpush1.msra.mxu0 %v520
        %626 = vmatprep.subr.mxu0 %v517
        %627 = vmatpush1.msra.mxu0 %v516
        %628 = vmatprep.subr.mxu0 %v513
        %629 = vmatpush1.msra.mxu0 %v512
        %630 = vmatprep.subr.mxu0 0.0
        %631 = vmatpush2.msra.mxu0 0.0
        %632 = vmatprep.subr.mxu0 0.0
        %633 = vmatpush2.msra.mxu0 0.0
        %634 = vmatprep.subr.mxu0 0.0
        %635 = vmatpush2.msra.mxu0 0.0
        %636 = vmatprep.subr.mxu0 0.0
        %637 = vmatpush2.msra.mxu0 0.0
        %638 = vmatprep.subr.mxu0 0.0
        %639 = vmatpush2.msra.mxu0 0.0
        %640 = vmatprep.subr.mxu0 0.0
        %641 = vmatpush2.msra.mxu0 0.0
        %642 = vmatprep.subr.mxu0 0.0
        %643 = vmatpush2.msra.mxu0 0.0
        %644 = vmatprep.subr.mxu0 0.0
        %645 = vmatpush2.msra.mxu0 0.0
        %646 = vmatprep.subr.mxu0 0.0
        %647 = vmatpush2.msra.mxu0 0.0
        %648 = vmatprep.subr.mxu0 0.0
        %649 = vmatpush2.msra.mxu0 0.0
        %650 = vmatprep.subr.mxu0 0.0
        %651 = vmatpush2.msra.mxu0 0.0
        %652 = vmatprep.subr.mxu0 0.0
        %653 = vmatpush2.msra.mxu0 0.0
        %654 = vmatprep.subr.mxu0 0.0
        %655 = vmatpush2.msra.mxu0 0.0
        %656 = vmatprep.subr.mxu0 0.0
        %657 = vmatpush2.msra.mxu0 0.0
        %658 = vmatprep.subr.mxu0 0.0
        %659 = vmatpush2.msra.mxu0 0.0
        %660 = vmatprep.subr.mxu0 0.0
        %661 = vmatpush2.msra.mxu0 0.0
        %662 = vmatprep.mubr.f32.mxu0 0.0
        %663 = vmatmul.mubr.f32.gmra.mxu0 %v510
        %v664 = vpop.f32.mrf.mxu0
        %v665 = vadd.f32 %v581, %v664
        %v666 = vpop.f32.mrf.mxu0
        %v667 = vadd.f32 %v585, %v666
        %668 = vmatprep.mubr.f32.mxu0 0.0
        %669 = vmatmul.mubr.f32.gmra.mxu0 %v511
        %v670 = vpop.f32.mrf.mxu0
        %v671 = vadd.f32 %v581, %v670
        %v672 = vpop.f32.mrf.mxu0
        %v673 = vadd.f32 %v585, %v672
        %674 = vdwg.mxu0
        %675 = vmatprep.subr.mxu0 %v575
        %676 = vmatpush1.msra.mxu0 %v574
        %677 = vmatprep.subr.mxu0 %v571
        %678 = vmatpush1.msra.mxu0 %v570
        %679 = vmatprep.subr.mxu0 %v567
        %680 = vmatpush1.msra.mxu0 %v566
        %681 = vmatprep.subr.mxu0 %v563
        %682 = vmatpush1.msra.mxu0 %v562
        %683 = vmatprep.subr.mxu0 %v559
        %684 = vmatpush1.msra.mxu0 %v558
        %685 = vmatprep.subr.mxu0 %v555
        %686 = vmatpush1.msra.mxu0 %v554
        %687 = vmatprep.subr.mxu0 %v551
        %688 = vmatpush1.msra.mxu0 %v550
        %689 = vmatprep.subr.mxu0 %v547
        %690 = vmatpush1.msra.mxu0 %v546
        %691 = vmatprep.subr.mxu0 %v543
        %692 = vmatpush1.msra.mxu0 %v542
        %693 = vmatprep.subr.mxu0 %v539
        %694 = vmatpush1.msra.mxu0 %v538
        %695 = vmatprep.subr.mxu0 %v535
        %696 = vmatpush1.msra.mxu0 %v534
        %697 = vmatprep.subr.mxu0 %v531
        %698 = vmatpush1.msra.mxu0 %v530
        %699 = vmatprep.subr.mxu0 %v527
        %700 = vmatpush1.msra.mxu0 %v526
        %701 = vmatprep.subr.mxu0 %v523
        %702 = vmatpush1.msra.mxu0 %v522
        %703 = vmatprep.subr.mxu0 %v519
        %704 = vmatpush1.msra.mxu0 %v518
        %705 = vmatprep.subr.mxu0 %v515
        %706 = vmatpush1.msra.mxu0 %v514
        %707 = vmatprep.subr.mxu0 0.0
        %708 = vmatpush2.msra.mxu0 0.0
        %709 = vmatprep.subr.mxu0 0.0
        %710 = vmatpush2.msra.mxu0 0.0
        %711 = vmatprep.subr.mxu0 0.0
        %712 = vmatpush2.msra.mxu0 0.0
        %713 = vmatprep.subr.mxu0 0.0
        %714 = vmatpush2.msra.mxu0 0.0
        %715 = vmatprep.subr.mxu0 0.0
        %716 = vmatpush2.msra.mxu0 0.0
        %717 = vmatprep.subr.mxu0 0.0
        %718 = vmatpush2.msra.mxu0 0.0
        %719 = vmatprep.subr.mxu0 0.0
        %720 = vmatpush2.msra.mxu0 0.0
        %721 = vmatprep.subr.mxu0 0.0
        %722 = vmatpush2.msra.mxu0 0.0
        %723 = vmatprep.subr.mxu0 0.0
        %724 = vmatpush2.msra.mxu0 0.0
        %725 = vmatprep.subr.mxu0 0.0
        %726 = vmatpush2.msra.mxu0 0.0
        %727 = vmatprep.subr.mxu0 0.0
        %728 = vmatpush2.msra.mxu0 0.0
        %729 = vmatprep.subr.mxu0 0.0
        %730 = vmatpush2.msra.mxu0 0.0
        %731 = vmatprep.subr.mxu0 0.0
        %732 = vmatpush2.msra.mxu0 0.0
        %733 = vmatprep.subr.mxu0 0.0
        %734 = vmatpush2.msra.mxu0 0.0
        %735 = vmatprep.subr.mxu0 0.0
        %736 = vmatpush2.msra.mxu0 0.0
        %737 = vmatprep.subr.mxu0 0.0
        %738 = vmatpush2.msra.mxu0 0.0
        %739 = vmatprep.mubr.f32.mxu0 0.0
        %740 = vmatmul.mubr.f32.gmra.mxu0 %v510
        %v741 = vpop.f32.mrf.mxu0
        %v742 = vadd.f32 %v589, %v741
        %v743 = vpop.f32.mrf.mxu0
        %v744 = vadd.f32 %v593, %v743
        %745 = vmatprep.mubr.f32.mxu0 0.0
        %746 = vmatmul.mubr.f32.gmra.mxu0 %v511
        %v747 = vpop.f32.mrf.mxu0
        %v748 = vadd.f32 %v589, %v747
        %v749 = vpop.f32.mrf.mxu0
        %v750 = vadd.f32 %v593, %v749
        %751 = vdwg.mxu0
        %752 = vst [vmem:[%s341] sm:$0xff] %v665
        %753 = vst [vmem:[%s341 + $0x8] sm:$0xff] %v667
        %754 = vst [vmem:[%s341 + $0x10] sm:$0xff] %v742
        %755 = vst [vmem:[%s341 + $0x18] sm:$0xff] %v744
        %756 = vst [vmem:[%s341 + $0x20] sm:$0xff] %v671
        %757 = vst [vmem:[%s341 + $0x28] sm:$0xff] %v673
        %758 = vst [vmem:[%s341 + $0x30] sm:$0xff] %v748
        %759 = vst [vmem:[%s341 + $0x38] sm:$0xff] %v750
        %s760 = sand.u32 %s166, 1
        %s761 = scalar_lea.sflag [#allocation5], %s760
        %s762 = sand.u32 %s166, 1
        %s763 = smul.addr %s762, 64
        %s764 = scalar_lea.vmem [#allocation12], %s763
        // Predicated region
        $region65: #{tpu_custom_call.1} parent=39 // pred_check
          %p765 = pneg %p176
        $region66: #{tpu_custom_call.1} parent=39 // pred_check_branch
          %767 = sbr.rel (%p765) target = $region68
        $region67: #{tpu_custom_call.1} parent=39 // pred_region
          %s768 = smul.u32 2, %s28
          %s769 = smul.u32 4, %s29
          %s771 = ssub.s32 1024, 1024
          %772 = vsyncadd %s761, %s771
          %s773 = smul.addr %s768, 8
          %s774 = sadd.s32 %s769, %s773
          %s775 = smul.addr %s774, 128
          %s776 = scalar_lea.hbm %s5, %s775
          %s777 = sshll.u32 %s764, 4
          %s778 = int_to_ptr.vmem [resolvable:$true] %s777
          %783 = dma.vmem_to_hbm [thread:$0]  %s778, 1024, %s776, %s761, 512, 1024, 32
        $region68: #{tpu_custom_call.1} parent=39 // pred_fallthru
          _
      $region40: #{tpu_custom_call.1} parent=5 // pred_fallthru
        _
      %p784 = scmp.le.s32.totalorder 2, %s19
      // Predicated region
      $region69: #{tpu_custom_call.1} parent=5 // pred_check
        %p785 = pneg %p784
      $region70: #{tpu_custom_call.1} parent=5 // pred_check_branch
        %787 = sbr.rel (%p785) target = $region72
      $region71: #{tpu_custom_call.1} parent=5 // pred_region
        %s788 = ssub.s32 %s19, 2
        // Predicated region
        $region73: #{tpu_custom_call.1} parent=71 // pred_check
          %p789 = pneg %p182
        $region74: #{tpu_custom_call.1} parent=71 // pred_check_branch
          %791 = sbr.rel (%p789) target = $region76
        $region75: #{tpu_custom_call.1} parent=71 // pred_region
          %s792 = sand.u32 %s167, 1
          %s793 = scalar_lea.sflag [#allocation5], %s792
          %s794 = sand.u32 %s167, 1
          %s795 = smul.addr %s794, 64
          %s796 = scalar_lea.vmem [#allocation12], %s795
          %797 = dma.done %s793, 1024
        $region76: #{tpu_custom_call.1} parent=71 // pred_fallthru
          _
      $region72: #{tpu_custom_call.1} parent=5 // pred_fallthru
        _
    $region6: #{tpu_custom_call.1} parent=1 // loop_footer
      %s23 = sadd.s32 1, %s19
    $region7: #{tpu_custom_call.1} parent=1 // loop_footer_branch
      %18 = sbr.rel target = $region3
    $region8: #{tpu_custom_call.1} parent=1 // loop_exit
      _
    %798 = vsyncpa [#allocation4], 1
    %s799 = scalar_lea.sflag [#allocation4], 1
    %800 = vsyncpa %s799, 1
    %801 = vsyncpa [#allocation7], 1
    %802 = vsyncpa [#allocation10], 1
    %s803 = scalar_lea.sflag [#allocation10], 1
    %804 = vsyncpa %s803, 1
    %805 = vsyncpa [#allocation5], 1
    %s806 = scalar_lea.sflag [#allocation5], 1
    %807 = vsyncpa %s806, 1

</llo_original>
